<compile_context>
chip_gen: v7x
topology: tpu7x:2x2x1
jax: 0.10.0
libtpu: 0.0.40
codegen_flags: <defaults>
</compile_context>

<pallas_src>
import jax
import jax.numpy as jnp
from jax.experimental import pallas as pl
from jax.experimental.pallas import tpu as pltpu


def _round_up(x: int, m: int) -> int:
    return ((x + m - 1) // m) * m


def _interp_matrix(out_size: int, in_size: int) -> jnp.ndarray:
    """Bilinear interpolation matrix [out_size, in_size], align_corners=True."""
    if out_size == 1 or in_size == 1:
        src = jnp.zeros((out_size,), jnp.float32)
    else:
        src = jnp.arange(out_size, dtype=jnp.float32) * (
            (in_size - 1) / (out_size - 1)
        )
    lo = jnp.clip(jnp.floor(src).astype(jnp.int32), 0, in_size - 1)
    hi = jnp.clip(lo + 1, 0, in_size - 1)
    frac = src - lo.astype(jnp.float32)
    rows = jnp.arange(out_size)
    mat = jnp.zeros((out_size, in_size), jnp.float32)
    mat = mat.at[rows, lo].add(1.0 - frac)
    mat = mat.at[rows, hi].add(frac)
    return mat


def _tpu_defaults():
    """(row_tile, vmem_limit_bytes) tuned per TPU generation."""
    try:
        kind = jax.devices()[0].device_kind.lower()
    except Exception:
        kind = ""
    if ("v4" in kind) or ("v5" in kind) or ("v6" in kind):
        # 128 MiB physical VMEM: big row tiles, raised scoped limit.
        return 128, 100 * 1024 * 1024
    if "v7" in kind:
        # 64 MiB physical VMEM per TC: smaller tiles, conservative limit.
        return 64, 48 * 1024 * 1024
    return 64, None  # unknown chip: conservative tile, default scoped limit


def _make_dsn_kernel(C, h_pad, Wp, tH, ignore_index):
    def kernel(tgt_ref, wh_ref, wwt_ref, x_ref, sum_ref, t_scratch):
        # New (head, sample): zero the per-(head, sample) accumulator and hoist
        # the r-invariant width-interpolation matmul into VMEM scratch (f32).
        @pl.when(pl.program_id(2) == 0)
        def _():
            sum_ref[...] = jnp.zeros_like(sum_ref)
            t = jnp.dot(x_ref[0, 0], wwt_ref[...],
                        preferred_element_type=jnp.float32)       # [C*h_pad, Wp]
            # h_pad % 8 == 0 -> this reshape is a free sublane view.
            t_scratch[...] = t.reshape(C, h_pad, Wp)

        tg = tgt_ref[0]                                           # [tH, Wp] int32
        valid = tg != ignore_index
        wh = wh_ref[...]                                          # [tH, h_pad] f32
        whb = jnp.broadcast_to(wh[None, :, :], (C, tH, h_pad))    # hoisted (no CSE)
        # Height interp: one C-batched MXU matmul, f32 in / f32 accumulate
        # (MXU has slack here; keeping f32 avoids double bf16 rounding).
        up = jnp.einsum("cih,chw->ciw", whb, t_scratch[...],
                        preferred_element_type=jnp.float32)       # [C, tH, Wp]

        # Softmax cross-entropy over channels, max-stabilized.  The exp-sum and
        # target-logit gather are fused into one per-channel pass over static
        # slices of `up` -- no iota / one-hot [C, tH, Wp] temporaries.
        m = jnp.max(up, axis=0)                                   # [tH, Wp]
        exp_sum = jnp.zeros((tH, Wp), jnp.float32)
        tgt_logit = jnp.zeros((tH, Wp), jnp.float32)
        for c in range(C):                                        # static unroll
            uc = up[c]
            exp_sum = exp_sum + jnp.exp(uc - m)
            tgt_logit = tgt_logit + jnp.where(tg == c, uc, 0.0)
        lse = m + jnp.log(exp_sum)
        sum_ref[...] += jnp.sum(jnp.where(valid, lse - tgt_logit, 0.0))

    return kernel


def _dsn_loss_sums(preds, target, ignore_index, compute_dtype,
                   row_tile, vmem_limit_bytes):
    """Unnormalized per-head CE loss sums over the batch (one pallas_call)."""
    n_heads = len(preds)
    N, C, h, w = preds[0].shape
    _, H, W = target.shape

    Wp = _round_up(W, 128)                 # lane-dense output width
    h_pad = _round_up(h, 8)                # free sublane-view reshape in-kernel
    row_tile = max(8, _round_up(int(row_tile), 8))
    tH = _round_up(H, 8) if H <= row_tile else row_tile
    Hp = _round_up(H, tH)                  # pad H so tH stays bounded for any H
    R = Hp // tH

    # Interpolation matrices: width path in compute_dtype (MXU input),
    # height path kept f32 (accuracy; cheap).
    wh = _interp_matrix(H, h)                                        # [H, h]
    wh = jnp.pad(wh, ((0, Hp - H), (0, h_pad - h)))                  # [Hp, h_pad]
    wwt = _interp_matrix(W, w).T                                     # [w, W]
    wwt = jnp.pad(wwt, ((0, 0), (0, Wp - W))).astype(compute_dtype)  # [w, Wp]

    # Padded target columns/rows flagged ignore_index -> contribute nothing.
    tgt = target.astype(jnp.int32)
    tgt = jnp.pad(tgt, ((0, 0), (0, Hp - H), (0, Wp - W)),
                  constant_values=ignore_index)                      # [N, Hp, Wp]

    # Heads stacked on a grid axis; zero-pad h -> h_pad, fold (C, h_pad).
    xs = jnp.stack([
        jnp.pad(p, ((0, 0), (0, 0), (0, h_pad - h), (0, 0))).reshape(N, C * h_pad, w)
        for p in preds
    ]).astype(compute_dtype)                          # [n_heads, N, C*h_pad, w]

    kernel = _make_dsn_kernel(C, h_pad, Wp, tH, ignore_index)

    in_specs = [
        pl.BlockSpec((1, tH, Wp), lambda hd, n, r: (n, r, 0)),        # target tile
        pl.BlockSpec((tH, h_pad), lambda hd, n, r: (r, 0)),           # Wh row tile
        pl.BlockSpec((w, Wp), lambda hd, n, r: (0, 0)),               # Wwt resident
        pl.BlockSpec((1, 1, C * h_pad, w),
                     lambda hd, n, r: (hd, n, 0, 0)),                 # logits (per head/sample)
    ]
    out_specs = pl.BlockSpec((1, 1, 1, 1), lambda hd, n, r: (hd, n, 0, 0))
    out_shape = jax.ShapeDtypeStruct((n_heads, N, 1, 1), jnp.float32)

    res = pl.pallas_call(
        kernel,
        out_shape=out_shape,
        grid_spec=pltpu.PrefetchScalarGridSpec(
            num_scalar_prefetch=0,
            grid=(n_heads, N, R),
            in_specs=in_specs,
            out_specs=out_specs,
            scratch_shapes=[pltpu.VMEM((C, h_pad, Wp), jnp.float32)],
        ),
        compiler_params=pltpu.CompilerParams(
            dimension_semantics=("parallel", "parallel", "arbitrary"),
            vmem_limit_bytes=vmem_limit_bytes,
        ),
    )(tgt, wh, wwt, xs)
    return jnp.sum(res, axis=(1, 2, 3))               # (n_heads,) per-head sums


def criterion_dsn(preds, target, ignore_index=255,
                  compute_dtype=jnp.bfloat16, row_tile=None,
                  vmem_limit_bytes=None):
    """Pallas equivalent of CriterionDSN.forward (preds: list of NCHW logits)."""
    preds = list(preds)
    default_tile, default_vmem = _tpu_defaults()
    if row_tile is None:
        row_tile = default_tile
    if vmem_limit_bytes is None:
        vmem_limit_bytes = default_vmem

    valid_cnt = jnp.sum((target != ignore_index).astype(jnp.float32))
    # TODO(synk): labels >= C (but != ignore_index) are silently treated as
    # logit 0 instead of raising like PyTorch's CrossEntropyLoss.
    if len(preds) >= 2:
        if preds[0].shape == preds[1].shape:
            sums = _dsn_loss_sums(preds[:2], target, ignore_index,
                                  compute_dtype, row_tile, vmem_limit_bytes)
            total = sums[0] + 0.4 * sums[1]
        else:  # heads at different resolutions -> separate (still fused) calls
            s1 = _dsn_loss_sums(preds[:1], target, ignore_index,
                                compute_dtype, row_tile, vmem_limit_bytes)[0]
            s2 = _dsn_loss_sums(preds[1:2], target, ignore_index,
                                compute_dtype, row_tile, vmem_limit_bytes)[0]
            total = s1 + 0.4 * s2
    else:
        total = _dsn_loss_sums(preds[:1], target, ignore_index,
                               compute_dtype, row_tile, vmem_limit_bytes)[0]
    # Guard: all-ignore target would otherwise give NaN (PyTorch returns 0-ish).
    return jnp.where(valid_cnt > 0, total / valid_cnt, 0.0)


# -------------------- pure-JAX reference for validation --------------------
def _ref_ce_loss(logits, target, ignore_index=255):
    N, C, h, w = logits.shape
    _, H, W = target.shape
    wh = _interp_matrix(H, h)
    ww = _interp_matrix(W, w)
    up = jnp.einsum("Hh,nchw,Ww->ncHW", wh, logits, ww)
    logp = jax.nn.log_softmax(up, axis=1)
    valid = target != ignore_index
    tgt_c = jnp.where(valid, target, 0)
    picked = jnp.take_along_axis(logp, tgt_c[:, None], axis=1)[:, 0]
    return -jnp.sum(jnp.where(valid, picked, 0.0)) / jnp.sum(valid)


def _ref_criterion_dsn(preds, target, ignore_index=255):
    if len(preds) >= 2:
        return _ref_ce_loss(preds[0], target, ignore_index) + 0.4 * _ref_ce_loss(
            preds[1], target, ignore_index
        )
    return _ref_ce_loss(preds[0], target, ignore_index)


if __name__ == "__main__":
    key = jax.random.PRNGKey(0)
    k1, k2, k3, k4 = jax.random.split(key, 4)

    N, C, h, w = 2, 4, 8, 8      # two low-res DSN prediction heads
    H, W = 16, 16                # target resolution
    IGNORE = 255

    pred0 = jax.random.normal(k1, (N, C, h, w), dtype=jnp.float32)
    pred1 = jax.random.normal(k2, (N, C, h, w), dtype=jnp.float32)
    target = jax.random.randint(k3, (N, H, W), 0, C).astype(jnp.int32)
    ignore_mask = jax.random.uniform(k4, (N, H, W)) < 0.1
    target = jnp.where(ignore_mask, IGNORE, target)

    ref = jax.block_until_ready(_ref_criterion_dsn([pred0, pred1], target, IGNORE))

    # f32 MXU path; row_tile=8 exercises the row-tiled accumulation (R = 2).
    loss_f32 = jax.block_until_ready(
        criterion_dsn([pred0, pred1], target, IGNORE,
                      compute_dtype=jnp.float32, row_tile=8))
    assert jnp.isfinite(loss_f32), "non-finite loss (f32 path)"
    assert abs(float(loss_f32) - float(ref)) < 5e-3, (float(loss_f32), float(ref))

    # bf16 MXU path with device-tuned defaults (row_tile / vmem limit).
    loss_bf16 = jax.block_until_ready(
        criterion_dsn([pred0, pred1], target, IGNORE))
    assert jnp.isfinite(loss_bf16), "non-finite loss (bf16 path)"
    assert abs(float(loss_bf16) - float(ref)) < 2e-2, (float(loss_bf16), float(ref))

    # Single-head path.
    ref1 = jax.block_until_ready(_ref_criterion_dsn([pred0], target, IGNORE))
    loss1 = jax.block_until_ready(criterion_dsn([pred0], target, IGNORE))
    assert abs(float(loss1) - float(ref1)) < 2e-2, (float(loss1), float(ref1))

    # Odd shapes exercise h/H/W padding (h_pad, Hp, Wp) and ignore masking.
    k5, k6, k7 = jax.random.split(k4, 3)
    h2, w2, H2, W2 = 7, 9, 18, 21
    p2 = jax.random.normal(k5, (N, C, h2, w2), dtype=jnp.float32)
    p3 = jax.random.normal(k6, (N, C, h2, w2), dtype=jnp.float32)
    t2 = jax.random.randint(k7, (N, H2, W2), 0, C).astype(jnp.int32)
    ref2 = jax.block_until_ready(_ref_criterion_dsn([p2, p3], t2, IGNORE))
    loss2 = jax.block_until_ready(
        criterion_dsn([p2, p3], t2, IGNORE, compute_dtype=jnp.float32, row_tile=8))
    assert abs(float(loss2) - float(ref2)) < 5e-3, (float(loss2), float(ref2))

    print("KERNEL_OK")
</pallas_src>

<mosaic_0001>
module attributes {stable_mosaic.version = 11 : i64} {
  func.func @kernel(%arg0: i32, %arg1: i32, %arg2: i32, %arg3: memref<1x8x128xi32, #tpu.memory_space<vmem>>, %arg4: memref<8x8xf32, #tpu.memory_space<vmem>>, %arg5: memref<8x128xf32, #tpu.memory_space<vmem>>, %arg6: memref<1x1x32x8xf32, #tpu.memory_space<vmem>>, %arg7: memref<1x1x1x1xf32, #tpu.memory_space<vmem>>, %arg8: memref<4x8x128xf32, #tpu.memory_space<vmem>>) attributes {dimension_semantics = [#tpu.dimension_semantics<parallel>, #tpu.dimension_semantics<parallel>, #tpu.dimension_semantics<arbitrary>], iteration_bounds = array<i64: 2, 2, 2>, scalar_prefetch = 0 : i64, scratch_operands = 1 : i64, tpu.core_type = #tpu.core_type<tc>, window_params = [{transform_indices = @transform_0, window_bounds = array<i64: 1, 8, 128>}, {transform_indices = @transform_1, window_bounds = array<i64: 8, 8>}, {pipeline_mode = #tpu.pipeline_mode<synchronous>, transform_indices = @transform_2, window_bounds = array<i64: 8, 128>}, {transform_indices = @transform_3, window_bounds = array<i64: 1, 1, 32, 8>}, {transform_indices = @transform_4, window_bounds = array<i64: 1, 1, 1, 1>}]} {
    %c0_i32 = arith.constant 0 : i32
    %0 = arith.cmpi eq, %arg2, %c0_i32 : i32
    %1 = arith.extui %0 : i1 to i32
    %c0_i32_0 = arith.constant 0 : i32
    %2 = arith.cmpi ne, %1, %c0_i32_0 : i32
    scf.if %2 {
      %cst_26 = arith.constant 0.000000e+00 : f32
      %69 = vector.broadcast %cst_26 : f32 to vector<1x1x1x1xf32>
      %c0_27 = arith.constant 0 : index
      %c0_28 = arith.constant 0 : index
      %c0_29 = arith.constant 0 : index
      %c0_30 = arith.constant 0 : index
      %70 = vector.load %arg7[%c0_27, %c0_28, %c0_29, %c0_30] : memref<1x1x1x1xf32, #tpu.memory_space<vmem>>, vector<1x1x1x1xf32>
      tpu.vector_store %arg7[%c0_27, %c0_28, %c0_29, %c0_30], %69 {strides = array<i32>} : memref<1x1x1x1xf32, #tpu.memory_space<vmem>>, vector<1x1x1x1xf32>,
      %c0_31 = arith.constant 0 : index
      %c0_32 = arith.constant 0 : index
      %c0_33 = arith.constant 0 : index
      %c0_34 = arith.constant 0 : index
      %71 = vector.load %arg6[%c0_31, %c0_32, %c0_33, %c0_34] : memref<1x1x32x8xf32, #tpu.memory_space<vmem>>, vector<1x1x32x8xf32>
      %72 = vector.shape_cast %71 : vector<1x1x32x8xf32> to vector<32x8xf32>
      %c0_35 = arith.constant 0 : index
      %c0_36 = arith.constant 0 : index
      %73 = vector.load %arg5[%c0_35, %c0_36] : memref<8x128xf32, #tpu.memory_space<vmem>>, vector<8x128xf32>
      %cst_37 = arith.constant dense<0.000000e+00> : vector<32x128xf32>
      %74 = tpu.matmul %72, %73, %cst_37 {dimension_numbers = #tpu.dot_dimension_numbers<[1], [0], [0], [1], [0, 0, 1, 1], [], []>} : vector<32x8xf32>, vector<8x128xf32>, vector<32x128xf32> -> vector<32x128xf32>
      %75 = vector.shape_cast %74 : vector<32x128xf32> to vector<4x8x128xf32>
      %c0_38 = arith.constant 0 : index
      %c0_39 = arith.constant 0 : index
      %c0_40 = arith.constant 0 : index
      %76 = vector.load %arg8[%c0_38, %c0_39, %c0_40] : memref<4x8x128xf32, #tpu.memory_space<vmem>>, vector<4x8x128xf32>
      tpu.vector_store %arg8[%c0_38, %c0_39, %c0_40], %75 {strides = array<i32>} : memref<4x8x128xf32, #tpu.memory_space<vmem>>, vector<4x8x128xf32>,
    } else {
    }
    %c0 = arith.constant 0 : index
    %c0_1 = arith.constant 0 : index
    %c0_2 = arith.constant 0 : index
    %3 = vector.load %arg3[%c0, %c0_1, %c0_2] : memref<1x8x128xi32, #tpu.memory_space<vmem>>, vector<1x8x128xi32>
    %4 = vector.shape_cast %3 : vector<1x8x128xi32> to vector<8x128xi32>
    %c255_i32 = arith.constant 255 : i32
    %5 = vector.broadcast %c255_i32 : i32 to vector<8x128xi32>
    %6 = arith.cmpi ne, %4, %5 : vector<8x128xi32>
    %c0_3 = arith.constant 0 : index
    %c0_4 = arith.constant 0 : index
    %7 = vector.load %arg4[%c0_3, %c0_4] : memref<8x8xf32, #tpu.memory_space<vmem>>, vector<8x8xf32>
    %8 = vector.shape_cast %7 : vector<8x8xf32> to vector<1x8x8xf32>
    %9 = vector.shape_cast %8 : vector<1x8x8xf32> to vector<1x8x8xf32>
    %10 = vector.broadcast %9 : vector<1x8x8xf32> to vector<4x8x8xf32>
    %c0_5 = arith.constant 0 : index
    %c0_6 = arith.constant 0 : index
    %c0_7 = arith.constant 0 : index
    %11 = vector.load %arg8[%c0_5, %c0_6, %c0_7] : memref<4x8x128xf32, #tpu.memory_space<vmem>>, vector<4x8x128xf32>
    "tpu.trace_start"() <{level = 10 : i32, message = "cih,chw->ciw"}> : () -> ()
    %cst = arith.constant dense<0.000000e+00> : vector<4x8x128xf32>
    %12 = tpu.matmul %10, %11, %cst {dimension_numbers = #tpu.dot_dimension_numbers<[2], [1], [1], [2], [0, 0, 0, 1, 1, 2], [0], [0]>} : vector<4x8x8xf32>, vector<4x8x128xf32>, vector<4x8x128xf32> -> vector<4x8x128xf32>
    "tpu.trace_stop"() : () -> ()
    %cst_8 = arith.constant dense<0xFF800000> : vector<8x128xf32>
    %13 = vector.multi_reduction <maximumf>, %12, %cst_8 [0] : vector<4x8x128xf32> to vector<8x128xf32>
    %cst_9 = arith.constant 0.000000e+00 : f32
    %14 = vector.broadcast %cst_9 : f32 to vector<8x128xf32>
    %cst_10 = arith.constant 0.000000e+00 : f32
    %15 = vector.broadcast %cst_10 : f32 to vector<8x128xf32>
    %16 = vector.extract_strided_slice %12 {offsets = [0, 0, 0], sizes = [1, 8, 128], strides = [1, 1, 1]} : vector<4x8x128xf32> to vector<1x8x128xf32>
    %17 = vector.shape_cast %16 : vector<1x8x128xf32> to vector<8x128xf32>
    %18 = arith.subf %17, %13 : vector<8x128xf32>
    %19 = math.exp %18 : vector<8x128xf32>
    %20 = arith.addf %14, %19 : vector<8x128xf32>
    %c0_i32_11 = arith.constant 0 : i32
    %21 = vector.broadcast %c0_i32_11 : i32 to vector<8x128xi32>
    %22 = arith.cmpi eq, %4, %21 : vector<8x128xi32>
    %cst_12 = arith.constant 0.000000e+00 : f32
    %23 = vector.broadcast %cst_12 : f32 to vector<8x128xf32>
    %24 = arith.select %22, %17, %23 : vector<8x128xi1>, vector<8x128xf32>
    %25 = arith.addf %15, %24 : vector<8x128xf32>
    %26 = vector.extract_strided_slice %12 {offsets = [1, 0, 0], sizes = [1, 8, 128], strides = [1, 1, 1]} : vector<4x8x128xf32> to vector<1x8x128xf32>
    %27 = vector.shape_cast %26 : vector<1x8x128xf32> to vector<8x128xf32>
    %28 = arith.subf %27, %13 : vector<8x128xf32>
    %29 = math.exp %28 : vector<8x128xf32>
    %30 = arith.addf %20, %29 : vector<8x128xf32>
    %c1_i32 = arith.constant 1 : i32
    %31 = vector.broadcast %c1_i32 : i32 to vector<8x128xi32>
    %32 = arith.cmpi eq, %4, %31 : vector<8x128xi32>
    %cst_13 = arith.constant 0.000000e+00 : f32
    %33 = vector.broadcast %cst_13 : f32 to vector<8x128xf32>
    %34 = arith.select %32, %27, %33 : vector<8x128xi1>, vector<8x128xf32>
    %35 = arith.addf %25, %34 : vector<8x128xf32>
    %36 = vector.extract_strided_slice %12 {offsets = [2, 0, 0], sizes = [1, 8, 128], strides = [1, 1, 1]} : vector<4x8x128xf32> to vector<1x8x128xf32>
    %37 = vector.shape_cast %36 : vector<1x8x128xf32> to vector<8x128xf32>
    %38 = arith.subf %37, %13 : vector<8x128xf32>
    %39 = math.exp %38 : vector<8x128xf32>
    %40 = arith.addf %30, %39 : vector<8x128xf32>
    %c2_i32 = arith.constant 2 : i32
    %41 = vector.broadcast %c2_i32 : i32 to vector<8x128xi32>
    %42 = arith.cmpi eq, %4, %41 : vector<8x128xi32>
    %cst_14 = arith.constant 0.000000e+00 : f32
    %43 = vector.broadcast %cst_14 : f32 to vector<8x128xf32>
    %44 = arith.select %42, %37, %43 : vector<8x128xi1>, vector<8x128xf32>
    %45 = arith.addf %35, %44 : vector<8x128xf32>
    %46 = vector.extract_strided_slice %12 {offsets = [3, 0, 0], sizes = [1, 8, 128], strides = [1, 1, 1]} : vector<4x8x128xf32> to vector<1x8x128xf32>
    %47 = vector.shape_cast %46 : vector<1x8x128xf32> to vector<8x128xf32>
    %48 = arith.subf %47, %13 : vector<8x128xf32>
    %49 = math.exp %48 : vector<8x128xf32>
    %50 = arith.addf %40, %49 : vector<8x128xf32>
    %c3_i32 = arith.constant 3 : i32
    %51 = vector.broadcast %c3_i32 : i32 to vector<8x128xi32>
    %52 = arith.cmpi eq, %4, %51 : vector<8x128xi32>
    %cst_15 = arith.constant 0.000000e+00 : f32
    %53 = vector.broadcast %cst_15 : f32 to vector<8x128xf32>
    %54 = arith.select %52, %47, %53 : vector<8x128xi1>, vector<8x128xf32>
    %55 = arith.addf %45, %54 : vector<8x128xf32>
    %56 = math.log %50 : vector<8x128xf32>
    %57 = arith.addf %13, %56 : vector<8x128xf32>
    %c0_16 = arith.constant 0 : index
    %c0_17 = arith.constant 0 : index
    %c0_18 = arith.constant 0 : index
    %c0_19 = arith.constant 0 : index
    %58 = vector.load %arg7[%c0_16, %c0_17, %c0_18, %c0_19] : memref<1x1x1x1xf32, #tpu.memory_space<vmem>>, vector<1x1x1x1xf32>
    %59 = arith.subf %57, %55 : vector<8x128xf32>
    %cst_20 = arith.constant 0.000000e+00 : f32
    %60 = vector.broadcast %cst_20 : f32 to vector<8x128xf32>
    %61 = arith.select %6, %59, %60 : vector<8x128xi1>, vector<8x128xf32>
    %62 = vector.shape_cast %61 : vector<8x128xf32> to vector<1x8x128xf32>
    %cst_21 = arith.constant dense<0.000000e+00> : vector<1xf32>
    %63 = vector.multi_reduction <add>, %62, %cst_21 [1, 2] : vector<1x8x128xf32> to vector<1xf32>
    %64 = vector.shape_cast %63 : vector<1xf32> to vector<1x1x1xf32>
    %65 = vector.extract %64[0, 0, 0] : f32 from vector<1x1x1xf32>
    %66 = vector.broadcast %65 : f32 to vector<1x1x1x1xf32>
    %67 = arith.addf %58, %66 : vector<1x1x1x1xf32>
    %c0_22 = arith.constant 0 : index
    %c0_23 = arith.constant 0 : index
    %c0_24 = arith.constant 0 : index
    %c0_25 = arith.constant 0 : index
    %68 = vector.load %arg7[%c0_22, %c0_23, %c0_24, %c0_25] : memref<1x1x1x1xf32, #tpu.memory_space<vmem>>, vector<1x1x1x1xf32>
    tpu.vector_store %arg7[%c0_22, %c0_23, %c0_24, %c0_25], %67 {strides = array<i32>} : memref<1x1x1x1xf32, #tpu.memory_space<vmem>>, vector<1x1x1x1xf32>,
    return
  }
  func.func @transform_0(%arg0: i32, %arg1: i32, %arg2: i32) -> (i32, i32, i32) {
    %c0_i32 = arith.constant 0 : i32
    %c0_i32_0 = arith.constant 0 : i32
    return %arg1, %arg2, %c0_i32 : i32, i32, i32
  }
  func.func @transform_1(%arg0: i32, %arg1: i32, %arg2: i32) -> (i32, i32) {
    %c0_i32 = arith.constant 0 : i32
    %c0_i32_0 = arith.constant 0 : i32
    return %arg2, %c0_i32 : i32, i32
  }
  func.func @transform_2(%arg0: i32, %arg1: i32, %arg2: i32) -> (i32, i32) {
    %c0_i32 = arith.constant 0 : i32
    %c0_i32_0 = arith.constant 0 : i32
    %c0_i32_1 = arith.constant 0 : i32
    return %c0_i32, %c0_i32_0 : i32, i32
  }
  func.func @transform_3(%arg0: i32, %arg1: i32, %arg2: i32) -> (i32, i32, i32, i32) {
    %c0_i32 = arith.constant 0 : i32
    %c0_i32_0 = arith.constant 0 : i32
    %c0_i32_1 = arith.constant 0 : i32
    return %arg0, %arg1, %c0_i32, %c0_i32_0 : i32, i32, i32, i32
  }
  func.func @transform_4(%arg0: i32, %arg1: i32, %arg2: i32) -> (i32, i32, i32, i32) {
    %c0_i32 = arith.constant 0 : i32
    %c0_i32_0 = arith.constant 0 : i32
    %c0_i32_1 = arith.constant 0 : i32
    return %arg0, %arg1, %c0_i32, %c0_i32_0 : i32, i32, i32, i32
  }
}

</mosaic_0001>

<llo_original>
// kernel: tpu_custom_call.1
$region0: #{tpu_custom_call.1}
  #allocation0 [shape = 'u32[]', space=smem, size = 0x4, offset = 0x4, fixed_abs, tag = 'smem constant byte address 0x4 - core index']
  #allocation1 [shape = 'u32[144,128]{1,0:T(1,128)}', space=vmem, size = 0x12000, scoped, tag = 'internal scratch']
  #allocation2 [shape = 'f32[4,8,128]{2,1,0:T(8,128)}', space=vmem, size = 0x4000, scoped, tag = 'scratch operand']
  %s0 = inlined_call_operand.vmem [shape: s32[2,16,128], index: 0, kind: input, shape index: {}]
  %s1 = inlined_call_operand.vmem [shape: f32[16,8], index: 1, kind: input, shape index: {}]
  %s2 = inlined_call_operand.vmem [shape: f32[8,128], index: 2, kind: input, shape index: {}]
  %s3 = inlined_call_operand.vmem [shape: f32[2,2,32,8], index: 3, kind: input, shape index: {}]
  %s4 = inlined_call_operand.vmem [shape: f32[2,2,1,1], index: 4, kind: output, shape index: {}]
  %s5 = sld [smem:[#allocation0]]
  $region53: #{tpu_custom_call.1} parent=0
    _
  %s7 = ssub.s32 1, %s5
  %s8 = scalar_select 0, %s7, %s5
  loop: start=0, step=1, limit=10
  $region2: #{tpu_custom_call.1} parent=0 // loop_pre_header
    _
  $region3: #{tpu_custom_call.1} parent=0 // loop_header
    %s10 = sphi 0, %s14
    %p11 = scmp.ge.s32.totalorder %s10, 10
    %s17 = sphi 0, %s36
    %s18 = sphi 0, %s32
    %s19 = sphi 0, %s28
    %s20 = sphi 0, %s17
    %s21 = sphi 0, %s18
    %s22 = sphi 0, %s19
    %s23 = sphi 0, %s20
    %s24 = sphi 0, %s21
    %s25 = sphi 0, %s22
    %s41 = sphi 0, %s43
    %s44 = sphi 0, %s41
    %s45 = sphi 0, %s44
    %s61 = sphi 0, %s45
    %s67 = sphi 0, %s69
    %s70 = sphi 0, %s67
    %s71 = sphi 0, %s70
    %s87 = sphi 0, %s71
    %s91 = sphi 0, %s91
    %s93 = sphi 0, %s91
    %s94 = sphi 0, %s93
    %s108 = sphi 0, %s94
    %s116 = sphi 0, %s118
    %s119 = sphi 0, %s116
    %s120 = sphi 0, %s119
    %s136 = sphi 0, %s120
    %s144 = sphi 0, %s146
    %s147 = sphi 0, %s144
    %s148 = sphi 0, %s147
    %s164 = sphi 0, %s148
  $region4: #{tpu_custom_call.1} parent=0 // loop_header_branch
    %13 = sbr.rel (%p11) target = $region8
  $region5: #{tpu_custom_call.1} parent=0 // loop_body
    %s15 = ssub.s32 %s10, 1
    %s16 = ssub.s32 %s10, 2
    %s26 = sadd.s32 1, %s19
    %p27 = scmp.ge.s32.totalorder %s26, 2
    %s28 = scalar_select %p27, 0, %s26
    %s29 = sadd.s32 1, %s18
    %s30 = scalar_select %p27, %s29, %s18
    %p31 = scmp.ge.s32.totalorder %s30, 2
    %s32 = scalar_select %p31, 0, %s30
    %s33 = sadd.s32 1, %s17
    %s34 = scalar_select %p31, %s33, %s17
    %p35 = scmp.ge.s32.totalorder %s34, 2
    %s36 = scalar_select %p35, 0, %s34
    %s37 = ssub.s32 %s18, %s32
    %s38 = ssub.s32 %s19, %s28
    %s39 = sor.u32 %s37, %s38
    %p40 = scmp.eq.s32.totalorder %s39, 0
    %s42 = sadd.s32 %s41, 1
    %s43 = scalar_select %p40, %s41, %s42
    %p46 = pneg %p40
    %p47 = scmp.eq.s32.totalorder %s10, 7
    %p48 = por %p46, %p47
    %p49 = scmp.ne.s32.totalorder %s41, %s44
    %p50 = scmp.eq.s32.totalorder %s10, 0
    %p51 = por %p49, %p50
    %p52 = scmp.ne.s32.totalorder %s41, %s44
    %p53 = scmp.eq.s32.totalorder %s15, 7
    %p54 = por %p52, %p53
    %p55 = scmp.ne.s32.totalorder %s44, %s45
    %p56 = scmp.eq.s32.totalorder %s15, 0
    %p57 = por %p55, %p56
    %p58 = scmp.ne.s32.totalorder %s44, %s45
    %p59 = scmp.eq.s32.totalorder %s16, 7
    %p60 = por %p58, %p59
    %p62 = scmp.ne.s32.totalorder %s45, %s61
    %p63 = scmp.eq.s32.totalorder %s16, 0
    %p64 = por %p62, %p63
    %s65 = ssub.s32 %s19, %s28
    %p66 = scmp.eq.s32.totalorder %s65, 0
    %s68 = sadd.s32 %s67, 1
    %s69 = scalar_select %p66, %s67, %s68
    %p72 = pneg %p66
    %p73 = scmp.eq.s32.totalorder %s10, 7
    %p74 = por %p72, %p73
    %p75 = scmp.ne.s32.totalorder %s67, %s70
    %p76 = scmp.eq.s32.totalorder %s10, 0
    %p77 = por %p75, %p76
    %p78 = scmp.ne.s32.totalorder %s67, %s70
    %p79 = scmp.eq.s32.totalorder %s15, 7
    %p80 = por %p78, %p79
    %p81 = scmp.ne.s32.totalorder %s70, %s71
    %p82 = scmp.eq.s32.totalorder %s15, 0
    %p83 = por %p81, %p82
    %p84 = scmp.ne.s32.totalorder %s70, %s71
    %p85 = scmp.eq.s32.totalorder %s16, 7
    %p86 = por %p84, %p85
    %p88 = scmp.ne.s32.totalorder %s71, %s87
    %p89 = scmp.eq.s32.totalorder %s16, 0
    %p90 = por %p88, %p89
    %s92 = sadd.s32 %s91, 1
    %p95 = scmp.eq.s32.totalorder %s10, 7
    %p96 = scmp.ne.s32.totalorder %s91, %s93
    %p97 = scmp.eq.s32.totalorder %s10, 0
    %p98 = por %p96, %p97
    %p99 = scmp.ne.s32.totalorder %s91, %s93
    %p100 = scmp.eq.s32.totalorder %s15, 7
    %p101 = por %p99, %p100
    %p102 = scmp.ne.s32.totalorder %s93, %s94
    %p103 = scmp.eq.s32.totalorder %s15, 0
    %p104 = por %p102, %p103
    %p105 = scmp.ne.s32.totalorder %s93, %s94
    %p106 = scmp.eq.s32.totalorder %s16, 7
    %p107 = por %p105, %p106
    %p109 = scmp.ne.s32.totalorder %s94, %s108
    %p110 = scmp.eq.s32.totalorder %s16, 0
    %p111 = por %p109, %p110
    %s112 = ssub.s32 %s17, %s36
    %s113 = ssub.s32 %s18, %s32
    %s114 = sor.u32 %s112, %s113
    %p115 = scmp.eq.s32.totalorder %s114, 0
    %s117 = sadd.s32 %s116, 1
    %s118 = scalar_select %p115, %s116, %s117
    %p121 = pneg %p115
    %p122 = scmp.eq.s32.totalorder %s10, 7
    %p123 = por %p121, %p122
    %p124 = scmp.ne.s32.totalorder %s116, %s119
    %p125 = scmp.eq.s32.totalorder %s10, 0
    %p126 = por %p124, %p125
    %p127 = scmp.ne.s32.totalorder %s116, %s119
    %p128 = scmp.eq.s32.totalorder %s15, 7
    %p129 = por %p127, %p128
    %p130 = scmp.ne.s32.totalorder %s119, %s120
    %p131 = scmp.eq.s32.totalorder %s15, 0
    %p132 = por %p130, %p131
    %p133 = scmp.ne.s32.totalorder %s119, %s120
    %p134 = scmp.eq.s32.totalorder %s16, 7
    %p135 = por %p133, %p134
    %p137 = scmp.ne.s32.totalorder %s120, %s136
    %p138 = scmp.eq.s32.totalorder %s16, 0
    %p139 = por %p137, %p138
    %s140 = ssub.s32 %s17, %s36
    %s141 = ssub.s32 %s18, %s32
    %s142 = sor.u32 %s140, %s141
    %p143 = scmp.eq.s32.totalorder %s142, 0
    %s145 = sadd.s32 %s144, 1
    %s146 = scalar_select %p143, %s144, %s145
    %p149 = pneg %p143
    %p150 = scmp.eq.s32.totalorder %s10, 7
    %p151 = por %p149, %p150
    %p152 = scmp.ne.s32.totalorder %s144, %s147
    %p153 = scmp.eq.s32.totalorder %s10, 0
    %p154 = por %p152, %p153
    %p155 = scmp.ne.s32.totalorder %s144, %s147
    %p156 = scmp.eq.s32.totalorder %s15, 7
    %p157 = por %p155, %p156
    %p158 = scmp.ne.s32.totalorder %s147, %s148
    %p159 = scmp.eq.s32.totalorder %s15, 0
    %p160 = por %p158, %p159
    %p161 = scmp.ne.s32.totalorder %s147, %s148
    %p162 = scmp.eq.s32.totalorder %s16, 7
    %p163 = por %p161, %p162
    %p165 = scmp.ne.s32.totalorder %s148, %s164
    %p166 = scmp.eq.s32.totalorder %s16, 0
    %p167 = por %p165, %p166
    %p168 = scmp.le.s32.totalorder 1, %s10
    %p169 = scmp.lt.s32.totalorder %s10, 9
    %p170 = pnand %p168, %p169
    %p171 = pneg %p170
    // Predicated region
    $region9: #{tpu_custom_call.1} parent=5 // pred_check
      _
    $region10: #{tpu_custom_call.1} parent=5 // pred_check_branch
      %173 = sbr.rel (%p170) target = $region12
    $region11: #{tpu_custom_call.1} parent=5 // pred_region
      %s174 = ssub.s32 %s10, 1
      // Predicated region
      $region13: #{tpu_custom_call.1} parent=11 // pred_check
        %p175 = pneg %p104
      $region14: #{tpu_custom_call.1} parent=11 // pred_check_branch
        %177 = sbr.rel (%p175) target = $region16
      $region15: #{tpu_custom_call.1} parent=11 // pred_region
        _
      $region16: #{tpu_custom_call.1} parent=11 // pred_fallthru
        _
    $region12: #{tpu_custom_call.1} parent=5 // pred_fallthru
      _
    %p178 = scmp.lt.s32.totalorder %s10, 8
    // Predicated region
    $region17: #{tpu_custom_call.1} parent=5 // pred_check
      %p179 = pneg %p178
    $region18: #{tpu_custom_call.1} parent=5 // pred_check_branch
      %181 = sbr.rel (%p179) target = $region20
    $region19: #{tpu_custom_call.1} parent=5 // pred_region
      // Predicated region
      $region21: #{tpu_custom_call.1} parent=19 // pred_check
        %p182 = pneg %p51
      $region22: #{tpu_custom_call.1} parent=19 // pred_check_branch
        %184 = sbr.rel (%p182) target = $region24
      $region23: #{tpu_custom_call.1} parent=19 // pred_region
        %p185 = scmp.lt.s32.totalorder %s18, 1
        %s186 = scalar_select %p185, %s18, 1
        %p187 = scmp.lt.s32.totalorder %s19, 1
        %s188 = scalar_select %p187, %s19, 1
        %s189 = smul.addr %s186, 2
        %s190 = sadd.s32 %s188, %s189
        %s191 = smul.addr %s190, 8
        %s192 = scalar_lea.vmem %s0, %s191
      $region24: #{tpu_custom_call.1} parent=19 // pred_fallthru
        _
      // Predicated region
      $region25: #{tpu_custom_call.1} parent=19 // pred_check
        %p193 = pneg %p77
      $region26: #{tpu_custom_call.1} parent=19 // pred_check_branch
        %195 = sbr.rel (%p193) target = $region28
      $region27: #{tpu_custom_call.1} parent=19 // pred_region
        %p196 = scmp.lt.s32.totalorder %s19, 1
        %s197 = scalar_select %p196, %s19, 1
        %s198 = smul.addr %s197, 8
        %s199 = scalar_lea.vmem %s1, %s198
      $region28: #{tpu_custom_call.1} parent=19 // pred_fallthru
        _
      // Predicated region
      $region29: #{tpu_custom_call.1} parent=19 // pred_check
        %p200 = pneg %p126
      $region30: #{tpu_custom_call.1} parent=19 // pred_check_branch
        %202 = sbr.rel (%p200) target = $region32
      $region31: #{tpu_custom_call.1} parent=19 // pred_region
        %p203 = scmp.lt.s32.totalorder %s17, 1
        %s204 = scalar_select %p203, %s17, 1
        %p205 = scmp.lt.s32.totalorder %s18, 1
        %s206 = scalar_select %p205, %s18, 1
        %s207 = smul.addr %s206, 4
        %s208 = smul.addr %s204, 8
        %s209 = sadd.s32 %s207, %s208
        %s210 = smul.addr %s209, 8
        %s211 = scalar_lea.vmem %s3, %s210
      $region32: #{tpu_custom_call.1} parent=19 // pred_fallthru
        _
    $region20: #{tpu_custom_call.1} parent=5 // pred_fallthru
      _
    %p212 = scmp.le.s32.totalorder 1, %s10
    %p213 = scmp.lt.s32.totalorder %s10, 9
    %p214 = pnand %p212, %p213
    %p215 = pneg %p214
    // Predicated region
    $region33: #{tpu_custom_call.1} parent=5 // pred_check
      _
    $region34: #{tpu_custom_call.1} parent=5 // pred_check_branch
      %217 = sbr.rel (%p214) target = $region36
    $region35: #{tpu_custom_call.1} parent=5 // pred_region
      %s218 = ssub.s32 %s10, 1
      %p219 = scmp.lt.s32.totalorder %s21, 1
      %s220 = scalar_select %p219, %s21, 1
      %p221 = scmp.lt.s32.totalorder %s22, 1
      %s222 = scalar_select %p221, %s22, 1
      %s223 = smul.addr %s220, 2
      %s224 = sadd.s32 %s222, %s223
      %s225 = smul.addr %s224, 8
      %s226 = scalar_lea.vmem %s0, %s225
      %p227 = pneg %p57
      %p228 = pneg %p54
      %p229 = scmp.lt.s32.totalorder %s22, 1
      %s230 = scalar_select %p229, %s22, 1
      %s231 = smul.addr %s230, 8
      %s232 = scalar_lea.vmem %s1, %s231
      %p233 = pneg %p83
      %p234 = pneg %p80
      %p235 = pneg %p104
      %p236 = pneg %p101
      %p237 = scmp.lt.s32.totalorder %s20, 1
      %s238 = scalar_select %p237, %s20, 1
      %p239 = scmp.lt.s32.totalorder %s21, 1
      %s240 = scalar_select %p239, %s21, 1
      %s241 = smul.addr %s240, 4
      %s242 = smul.addr %s238, 8
      %s243 = sadd.s32 %s241, %s242
      %s244 = smul.addr %s243, 8
      %s245 = scalar_lea.vmem %s3, %s244
      %p246 = pneg %p132
      %p247 = pneg %p129
      %p248 = pneg %p160
      %p249 = pneg %p157
      %p250 = scmp.lt.s32.totalorder %s20, 1
      %s251 = scalar_select %p250, %s20, 1
      %p252 = scmp.lt.s32.totalorder %s21, 1
      %s253 = scalar_select %p252, %s21, 1
      %s254 = smul.addr %s251, 2
      %s255 = sadd.s32 %s253, %s254
      %s256 = scalar_lea.vmem %s4, %s255
      %p257 = scmp.lt.s32.totalorder %s21, 1
      %s258 = scalar_select %p257, %s21, 1
      %p259 = scmp.lt.s32.totalorder %s22, 1
      %s260 = scalar_select %p259, %s22, 1
      %s261 = smul.addr %s258, 2
      %s262 = sadd.s32 %s260, %s261
      %s263 = smul.addr %s262, 8
      %s264 = scalar_lea.vmem %s0, %s263
      %p265 = scmp.lt.s32.totalorder %s22, 1
      %s266 = scalar_select %p265, %s22, 1
      %s267 = smul.addr %s266, 8
      %s268 = scalar_lea.vmem %s1, %s267
      %p269 = scmp.lt.s32.totalorder %s20, 1
      %s270 = scalar_select %p269, %s20, 1
      %p271 = scmp.lt.s32.totalorder %s21, 1
      %s272 = scalar_select %p271, %s21, 1
      %s273 = smul.addr %s272, 4
      %s274 = smul.addr %s270, 8
      %s275 = sadd.s32 %s273, %s274
      %s276 = smul.addr %s275, 8
      %s277 = scalar_lea.vmem %s3, %s276
      %p278 = scmp.lt.s32.totalorder %s20, 1
      %s279 = scalar_select %p278, %s20, 1
      %p280 = scmp.lt.s32.totalorder %s21, 1
      %s281 = scalar_select %p280, %s21, 1
      %s282 = smul.addr %s279, 2
      %s283 = sadd.s32 %s281, %s282
      %s284 = scalar_lea.vmem %s4, %s283
      %p285 = scmp.eq.s32.totalorder %s22, 0
      // Predicated region
      $region37: #{tpu_custom_call.1} parent=35 // pred_check
        %p286 = pneg %p285
      $region38: #{tpu_custom_call.1} parent=35 // pred_check_branch
        %288 = sbr.rel (%p286) target = $region40
      $region39: #{tpu_custom_call.1} parent=35 // pred_region
        %vm289 = vcmask 0
        %290 = vst.msk [vmem:[%s284] sm:$0x1] %vm289, 0.0
        %v291 = vld [vmem:[%s277] sm:$0xff]
        %v292 = vld [vmem:[%s277 + $0x8] sm:$0xff]
        %v293 = vld [vmem:[%s277 + $0x10] sm:$0xff]
        %v294 = vld [vmem:[%s277 + $0x18] sm:$0xff]
        %v295 = vld [vmem:[%s2] sm:$0xff]
        %vm296 = vcmask 64512
        %v298 = vsel %vm296, %v291, 0
        %v301 = vsel %vm296, %v292, 0
        %v304 = vsel %vm296, %v293, 0
        %v307 = vsel %vm296, %v294, 0
        %309 = vmatprep.subr.mxu0 0.0
        %310 = vmatpush1.msra.mxu0 %v295
        %311 = vmatprep.subr.mxu0 0.0
        %312 = vmatpush1.msra.mxu0 0.0
        %313 = vmatprep.subr.mxu0 0.0
        %314 = vmatpush1.msra.mxu0 0.0
        %315 = vmatprep.subr.mxu0 0.0
        %316 = vmatpush1.msra.mxu0 0.0
        %317 = vmatprep.subr.mxu0 0.0
        %318 = vmatpush1.msra.mxu0 0.0
        %319 = vmatprep.subr.mxu0 0.0
        %320 = vmatpush1.msra.mxu0 0.0
        %321 = vmatprep.subr.mxu0 0.0
        %322 = vmatpush1.msra.mxu0 0.0
        %323 = vmatprep.subr.mxu0 0.0
        %324 = vmatpush1.msra.mxu0 0.0
        %325 = vmatprep.subr.mxu0 0.0
        %326 = vmatpush1.msra.mxu0 0.0
        %327 = vmatprep.subr.mxu0 0.0
        %328 = vmatpush1.msra.mxu0 0.0
        %329 = vmatprep.subr.mxu0 0.0
        %330 = vmatpush1.msra.mxu0 0.0
        %331 = vmatprep.subr.mxu0 0.0
        %332 = vmatpush1.msra.mxu0 0.0
        %333 = vmatprep.subr.mxu0 0.0
        %334 = vmatpush1.msra.mxu0 0.0
        %335 = vmatprep.subr.mxu0 0.0
        %336 = vmatpush1.msra.mxu0 0.0
        %337 = vmatprep.subr.mxu0 0.0
        %338 = vmatpush1.msra.mxu0 0.0
        %339 = vmatprep.subr.mxu0 0.0
        %340 = vmatpush1.msra.mxu0 0.0
        %341 = vmatprep.subr.mxu0 0.0
        %342 = vmatpush1.msra.mxu0 0.0
        %343 = vmatprep.subr.mxu0 0.0
        %344 = vmatpush1.msra.mxu0 0.0
        %345 = vmatprep.subr.mxu0 0.0
        %346 = vmatpush1.msra.mxu0 0.0
        %347 = vmatprep.subr.mxu0 0.0
        %348 = vmatpush1.msra.mxu0 0.0
        %349 = vmatprep.subr.mxu0 0.0
        %350 = vmatpush1.msra.mxu0 0.0
        %351 = vmatprep.subr.mxu0 0.0
        %352 = vmatpush1.msra.mxu0 0.0
        %353 = vmatprep.subr.mxu0 0.0
        %354 = vmatpush1.msra.mxu0 0.0
        %355 = vmatprep.subr.mxu0 0.0
        %356 = vmatpush1.msra.mxu0 0.0
        %357 = vmatprep.subr.mxu0 0.0
        %358 = vmatpush1.msra.mxu0 0.0
        %359 = vmatprep.subr.mxu0 0.0
        %360 = vmatpush1.msra.mxu0 0.0
        %361 = vmatprep.subr.mxu0 0.0
        %362 = vmatpush1.msra.mxu0 0.0
        %363 = vmatprep.subr.mxu0 0.0
        %364 = vmatpush1.msra.mxu0 0.0
        %365 = vmatprep.subr.mxu0 0.0
        %366 = vmatpush1.msra.mxu0 0.0
        %367 = vmatprep.subr.mxu0 0.0
        %368 = vmatpush1.msra.mxu0 0.0
        %369 = vmatprep.subr.mxu0 0.0
        %370 = vmatpush1.msra.mxu0 0.0
        %371 = vmatprep.subr.mxu0 0.0
        %372 = vmatpush1.msra.mxu0 0.0
        %373 = vmatprep.mubr.f32.mxu0 0.0
        %374 = vmatmul.mubr.f32.gmra.mrb[0].mxu0 %v298
        %v375 = vpop.f32.mrb[0].mxu0
        %v376 = vadd.f32 0.0, %v375
        %v377 = vpop.f32.mrb[0].mxu0
        %378 = vmatprep.mubr.f32.mxu0 0.0
        %379 = vmatmul.mubr.f32.gmra.mrb[0].mxu0 %v301
        %v380 = vpop.f32.mrb[0].mxu0
        %v381 = vadd.f32 0.0, %v380
        %v382 = vpop.f32.mrb[0].mxu0
        %383 = vmatprep.mubr.f32.mxu0 0.0
        %384 = vmatmul.mubr.f32.gmra.mrb[0].mxu0 %v304
        %v385 = vpop.f32.mrb[0].mxu0
        %v386 = vadd.f32 0.0, %v385
        %v387 = vpop.f32.mrb[0].mxu0
        %388 = vmatprep.mubr.f32.mxu0 0.0
        %389 = vmatmul.mubr.f32.gmra.mrb[0].mxu0 %v307
        %v390 = vpop.f32.mrb[0].mxu0
        %v391 = vadd.f32 0.0, %v390
        %v392 = vpop.f32.mrb[0].mxu0
        %393 = vdwg.mxu0
        %394 = vst [vmem:[#allocation2] sm:$0xff] %v376
        %395 = vst [vmem:[#allocation2 + $0x8] sm:$0xff] %v381
        %396 = vst [vmem:[#allocation2 + $0x10] sm:$0xff] %v386
        %397 = vst [vmem:[#allocation2 + $0x18] sm:$0xff] %v391
      $region40: #{tpu_custom_call.1} parent=35 // pred_fallthru
        _
      %v398 = vld [vmem:[%s264] sm:$0xff]
      %vm399 = vcmp.ne.s32.totalorder %v398, 255
      %v400 = vld [vmem:[%s268] sm:$0xff]
      %v401 = vld [vmem:[#allocation2] sm:$0xff]
      %v402 = vld [vmem:[#allocation2 + $0x8] sm:$0xff]
      %v403 = vld [vmem:[#allocation2 + $0x10] sm:$0xff]
      %v404 = vld [vmem:[#allocation2 + $0x18] sm:$0xff]
      %vm405 = vcmask 64512
      %v407 = vsel %vm405, %v400, 0
      %409 = vmatprep.subr.mxu0 0.0
      %410 = vmatpush1.msra.mxu0 %v401
      %411 = vmatprep.subr.mxu0 0.0
      %412 = vmatpush1.msra.mxu0 0.0
      %413 = vmatprep.subr.mxu0 0.0
      %414 = vmatpush1.msra.mxu0 0.0
      %415 = vmatprep.subr.mxu0 0.0
      %416 = vmatpush1.msra.mxu0 0.0
      %417 = vmatprep.subr.mxu0 0.0
      %418 = vmatpush1.msra.mxu0 0.0
      %419 = vmatprep.subr.mxu0 0.0
      %420 = vmatpush1.msra.mxu0 0.0
      %421 = vmatprep.subr.mxu0 0.0
      %422 = vmatpush1.msra.mxu0 0.0
      %423 = vmatprep.subr.mxu0 0.0
      %424 = vmatpush1.msra.mxu0 0.0
      %425 = vmatprep.subr.mxu0 0.0
      %426 = vmatpush1.msra.mxu0 0.0
      %427 = vmatprep.subr.mxu0 0.0
      %428 = vmatpush1.msra.mxu0 0.0
      %429 = vmatprep.subr.mxu0 0.0
      %430 = vmatpush1.msra.mxu0 0.0
      %431 = vmatprep.subr.mxu0 0.0
      %432 = vmatpush1.msra.mxu0 0.0
      %433 = vmatprep.subr.mxu0 0.0
      %434 = vmatpush1.msra.mxu0 0.0
      %435 = vmatprep.subr.mxu0 0.0
      %436 = vmatpush1.msra.mxu0 0.0
      %437 = vmatprep.subr.mxu0 0.0
      %438 = vmatpush1.msra.mxu0 0.0
      %439 = vmatprep.subr.mxu0 0.0
      %440 = vmatpush1.msra.mxu0 0.0
      %441 = vmatprep.subr.mxu0 0.0
      %442 = vmatpush1.msra.mxu0 0.0
      %443 = vmatprep.subr.mxu0 0.0
      %444 = vmatpush1.msra.mxu0 0.0
      %445 = vmatprep.subr.mxu0 0.0
      %446 = vmatpush1.msra.mxu0 0.0
      %447 = vmatprep.subr.mxu0 0.0
      %448 = vmatpush1.msra.mxu0 0.0
      %449 = vmatprep.subr.mxu0 0.0
      %450 = vmatpush1.msra.mxu0 0.0
      %451 = vmatprep.subr.mxu0 0.0
      %452 = vmatpush1.msra.mxu0 0.0
      %453 = vmatprep.subr.mxu0 0.0
      %454 = vmatpush1.msra.mxu0 0.0
      %455 = vmatprep.subr.mxu0 0.0
      %456 = vmatpush1.msra.mxu0 0.0
      %457 = vmatprep.subr.mxu0 0.0
      %458 = vmatpush1.msra.mxu0 0.0
      %459 = vmatprep.subr.mxu0 0.0
      %460 = vmatpush1.msra.mxu0 0.0
      %461 = vmatprep.subr.mxu0 0.0
      %462 = vmatpush1.msra.mxu0 0.0
      %463 = vmatprep.subr.mxu0 0.0
      %464 = vmatpush1.msra.mxu0 0.0
      %465 = vmatprep.subr.mxu0 0.0
      %466 = vmatpush1.msra.mxu0 0.0
      %467 = vmatprep.subr.mxu0 0.0
      %468 = vmatpush1.msra.mxu0 0.0
      %469 = vmatprep.subr.mxu0 0.0
      %470 = vmatpush1.msra.mxu0 0.0
      %471 = vmatprep.subr.mxu0 0.0
      %472 = vmatpush1.msra.mxu0 0.0
      %473 = vmatprep.mubr.f32.mxu0 0.0
      %474 = vmatmul.mubr.f32.gmra.mrb[0].mxu0 %v407
      %v475 = vpop.f32.mrb[0].mxu0
      %v476 = vadd.f32 0.0, %v475
      %v477 = vpop.f32.mrb[0].mxu0
      %478 = vdwg.mxu0
      %479 = vmatprep.subr.mxu0 0.0
      %480 = vmatpush1.msra.mxu0 %v402
      %481 = vmatprep.subr.mxu0 0.0
      %482 = vmatpush1.msra.mxu0 0.0
      %483 = vmatprep.subr.mxu0 0.0
      %484 = vmatpush1.msra.mxu0 0.0
      %485 = vmatprep.subr.mxu0 0.0
      %486 = vmatpush1.msra.mxu0 0.0
      %487 = vmatprep.subr.mxu0 0.0
      %488 = vmatpush1.msra.mxu0 0.0
      %489 = vmatprep.subr.mxu0 0.0
      %490 = vmatpush1.msra.mxu0 0.0
      %491 = vmatprep.subr.mxu0 0.0
      %492 = vmatpush1.msra.mxu0 0.0
      %493 = vmatprep.subr.mxu0 0.0
      %494 = vmatpush1.msra.mxu0 0.0
      %495 = vmatprep.subr.mxu0 0.0
      %496 = vmatpush1.msra.mxu0 0.0
      %497 = vmatprep.subr.mxu0 0.0
      %498 = vmatpush1.msra.mxu0 0.0
      %499 = vmatprep.subr.mxu0 0.0
      %500 = vmatpush1.msra.mxu0 0.0
      %501 = vmatprep.subr.mxu0 0.0
      %502 = vmatpush1.msra.mxu0 0.0
      %503 = vmatprep.subr.mxu0 0.0
      %504 = vmatpush1.msra.mxu0 0.0
      %505 = vmatprep.subr.mxu0 0.0
      %506 = vmatpush1.msra.mxu0 0.0
      %507 = vmatprep.subr.mxu0 0.0
      %508 = vmatpush1.msra.mxu0 0.0
      %509 = vmatprep.subr.mxu0 0.0
      %510 = vmatpush1.msra.mxu0 0.0
      %511 = vmatprep.subr.mxu0 0.0
      %512 = vmatpush1.msra.mxu0 0.0
      %513 = vmatprep.subr.mxu0 0.0
      %514 = vmatpush1.msra.mxu0 0.0
      %515 = vmatprep.subr.mxu0 0.0
      %516 = vmatpush1.msra.mxu0 0.0
      %517 = vmatprep.subr.mxu0 0.0
      %518 = vmatpush1.msra.mxu0 0.0
      %519 = vmatprep.subr.mxu0 0.0
      %520 = vmatpush1.msra.mxu0 0.0
      %521 = vmatprep.subr.mxu0 0.0
      %522 = vmatpush1.msra.mxu0 0.0
      %523 = vmatprep.subr.mxu0 0.0
      %524 = vmatpush1.msra.mxu0 0.0
      %525 = vmatprep.subr.mxu0 0.0
      %526 = vmatpush1.msra.mxu0 0.0
      %527 = vmatprep.subr.mxu0 0.0
      %528 = vmatpush1.msra.mxu0 0.0
      %529 = vmatprep.subr.mxu0 0.0
      %530 = vmatpush1.msra.mxu0 0.0
      %531 = vmatprep.subr.mxu0 0.0
      %532 = vmatpush1.msra.mxu0 0.0
      %533 = vmatprep.subr.mxu0 0.0
      %534 = vmatpush1.msra.mxu0 0.0
      %535 = vmatprep.subr.mxu0 0.0
      %536 = vmatpush1.msra.mxu0 0.0
      %537 = vmatprep.subr.mxu0 0.0
      %538 = vmatpush1.msra.mxu0 0.0
      %539 = vmatprep.subr.mxu0 0.0
      %540 = vmatpush1.msra.mxu0 0.0
      %541 = vmatprep.subr.mxu0 0.0
      %542 = vmatpush1.msra.mxu0 0.0
      %543 = vmatprep.mubr.f32.mxu0 0.0
      %544 = vmatmul.mubr.f32.gmra.mrb[0].mxu0 %v407
      %v545 = vpop.f32.mrb[0].mxu0
      %v546 = vadd.f32 0.0, %v545
      %v547 = vpop.f32.mrb[0].mxu0
      %548 = vdwg.mxu0
      %549 = vmatprep.subr.mxu0 0.0
      %550 = vmatpush1.msra.mxu0 %v403
      %551 = vmatprep.subr.mxu0 0.0
      %552 = vmatpush1.msra.mxu0 0.0
      %553 = vmatprep.subr.mxu0 0.0
      %554 = vmatpush1.msra.mxu0 0.0
      %555 = vmatprep.subr.mxu0 0.0
      %556 = vmatpush1.msra.mxu0 0.0
      %557 = vmatprep.subr.mxu0 0.0
      %558 = vmatpush1.msra.mxu0 0.0
      %559 = vmatprep.subr.mxu0 0.0
      %560 = vmatpush1.msra.mxu0 0.0
      %561 = vmatprep.subr.mxu0 0.0
      %562 = vmatpush1.msra.mxu0 0.0
      %563 = vmatprep.subr.mxu0 0.0
      %564 = vmatpush1.msra.mxu0 0.0
      %565 = vmatprep.subr.mxu0 0.0
      %566 = vmatpush1.msra.mxu0 0.0
      %567 = vmatprep.subr.mxu0 0.0
      %568 = vmatpush1.msra.mxu0 0.0
      %569 = vmatprep.subr.mxu0 0.0
      %570 = vmatpush1.msra.mxu0 0.0
      %571 = vmatprep.subr.mxu0 0.0
      %572 = vmatpush1.msra.mxu0 0.0
      %573 = vmatprep.subr.mxu0 0.0
      %574 = vmatpush1.msra.mxu0 0.0
      %575 = vmatprep.subr.mxu0 0.0
      %576 = vmatpush1.msra.mxu0 0.0
      %577 = vmatprep.subr.mxu0 0.0
      %578 = vmatpush1.msra.mxu0 0.0
      %579 = vmatprep.subr.mxu0 0.0
      %580 = vmatpush1.msra.mxu0 0.0
      %581 = vmatprep.subr.mxu0 0.0
      %582 = vmatpush1.msra.mxu0 0.0
      %583 = vmatprep.subr.mxu0 0.0
      %584 = vmatpush1.msra.mxu0 0.0
      %585 = vmatprep.subr.mxu0 0.0
      %586 = vmatpush1.msra.mxu0 0.0
      %587 = vmatprep.subr.mxu0 0.0
      %588 = vmatpush1.msra.mxu0 0.0
      %589 = vmatprep.subr.mxu0 0.0
      %590 = vmatpush1.msra.mxu0 0.0
      %591 = vmatprep.subr.mxu0 0.0
      %592 = vmatpush1.msra.mxu0 0.0
      %593 = vmatprep.subr.mxu0 0.0
      %594 = vmatpush1.msra.mxu0 0.0
      %595 = vmatprep.subr.mxu0 0.0
      %596 = vmatpush1.msra.mxu0 0.0
      %597 = vmatprep.subr.mxu0 0.0
      %598 = vmatpush1.msra.mxu0 0.0
      %599 = vmatprep.subr.mxu0 0.0
      %600 = vmatpush1.msra.mxu0 0.0
      %601 = vmatprep.subr.mxu0 0.0
      %602 = vmatpush1.msra.mxu0 0.0
      %603 = vmatprep.subr.mxu0 0.0
      %604 = vmatpush1.msra.mxu0 0.0
      %605 = vmatprep.subr.mxu0 0.0
      %606 = vmatpush1.msra.mxu0 0.0
      %607 = vmatprep.subr.mxu0 0.0
      %608 = vmatpush1.msra.mxu0 0.0
      %609 = vmatprep.subr.mxu0 0.0
      %610 = vmatpush1.msra.mxu0 0.0
      %611 = vmatprep.subr.mxu0 0.0
      %612 = vmatpush1.msra.mxu0 0.0
      %613 = vmatprep.mubr.f32.mxu0 0.0
      %614 = vmatmul.mubr.f32.gmra.mrb[0].mxu0 %v407
      %v615 = vpop.f32.mrb[0].mxu0
      %v616 = vadd.f32 0.0, %v615
      %v617 = vpop.f32.mrb[0].mxu0
      %618 = vdwg.mxu0
      %619 = vmatprep.subr.mxu0 0.0
      %620 = vmatpush1.msra.mxu0 %v404
      %621 = vmatprep.subr.mxu0 0.0
      %622 = vmatpush1.msra.mxu0 0.0
      %623 = vmatprep.subr.mxu0 0.0
      %624 = vmatpush1.msra.mxu0 0.0
      %625 = vmatprep.subr.mxu0 0.0
      %626 = vmatpush1.msra.mxu0 0.0
      %627 = vmatprep.subr.mxu0 0.0
      %628 = vmatpush1.msra.mxu0 0.0
      %629 = vmatprep.subr.mxu0 0.0
      %630 = vmatpush1.msra.mxu0 0.0
      %631 = vmatprep.subr.mxu0 0.0
      %632 = vmatpush1.msra.mxu0 0.0
      %633 = vmatprep.subr.mxu0 0.0
      %634 = vmatpush1.msra.mxu0 0.0
      %635 = vmatprep.subr.mxu0 0.0
      %636 = vmatpush1.msra.mxu0 0.0
      %637 = vmatprep.subr.mxu0 0.0
      %638 = vmatpush1.msra.mxu0 0.0
      %639 = vmatprep.subr.mxu0 0.0
      %640 = vmatpush1.msra.mxu0 0.0
      %641 = vmatprep.subr.mxu0 0.0
      %642 = vmatpush1.msra.mxu0 0.0
      %643 = vmatprep.subr.mxu0 0.0
      %644 = vmatpush1.msra.mxu0 0.0
      %645 = vmatprep.subr.mxu0 0.0
      %646 = vmatpush1.msra.mxu0 0.0
      %647 = vmatprep.subr.mxu0 0.0
      %648 = vmatpush1.msra.mxu0 0.0
      %649 = vmatprep.subr.mxu0 0.0
      %650 = vmatpush1.msra.mxu0 0.0
      %651 = vmatprep.subr.mxu0 0.0
      %652 = vmatpush1.msra.mxu0 0.0
      %653 = vmatprep.subr.mxu0 0.0
      %654 = vmatpush1.msra.mxu0 0.0
      %655 = vmatprep.subr.mxu0 0.0
      %656 = vmatpush1.msra.mxu0 0.0
      %657 = vmatprep.subr.mxu0 0.0
      %658 = vmatpush1.msra.mxu0 0.0
      %659 = vmatprep.subr.mxu0 0.0
      %660 = vmatpush1.msra.mxu0 0.0
      %661 = vmatprep.subr.mxu0 0.0
      %662 = vmatpush1.msra.mxu0 0.0
      %663 = vmatprep.subr.mxu0 0.0
      %664 = vmatpush1.msra.mxu0 0.0
      %665 = vmatprep.subr.mxu0 0.0
      %666 = vmatpush1.msra.mxu0 0.0
      %667 = vmatprep.subr.mxu0 0.0
      %668 = vmatpush1.msra.mxu0 0.0
      %669 = vmatprep.subr.mxu0 0.0
      %670 = vmatpush1.msra.mxu0 0.0
      %671 = vmatprep.subr.mxu0 0.0
      %672 = vmatpush1.msra.mxu0 0.0
      %673 = vmatprep.subr.mxu0 0.0
      %674 = vmatpush1.msra.mxu0 0.0
      %675 = vmatprep.subr.mxu0 0.0
      %676 = vmatpush1.msra.mxu0 0.0
      %677 = vmatprep.subr.mxu0 0.0
      %678 = vmatpush1.msra.mxu0 0.0
      %679 = vmatprep.subr.mxu0 0.0
      %680 = vmatpush1.msra.mxu0 0.0
      %681 = vmatprep.subr.mxu0 0.0
      %682 = vmatpush1.msra.mxu0 0.0
      %683 = vmatprep.mubr.f32.mxu0 0.0
      %684 = vmatmul.mubr.f32.gmra.mrb[0].mxu0 %v407
      %v685 = vpop.f32.mrb[0].mxu0
      %v686 = vadd.f32 0.0, %v685
      %v687 = vpop.f32.mrb[0].mxu0
      %688 = vdwg.mxu0
      %v689 = vmax.f32 %v476, %v546
      %v690 = vmax.f32 %v616, %v686
      %v691 = vmax.f32 %v689, %v690
      %v692 = vsub.f32 %v476, %v691
      %v693 = vmul.f32 %v692, 1.442695
      %v694 = vpow.pop %v693
      %v695 = vadd.f32 %v694, 0.0
      %vm696 = vcmp.eq.s32.totalorder %v398, 0
      %v697 = vsel %vm696, %v476, 0.0
      %v698 = vadd.f32 %v697, 0.0
      %v699 = vsub.f32 %v546, %v691
      %v700 = vmul.f32 %v699, 1.442695
      %v701 = vpow.pop %v700
      %v702 = vadd.f32 %v695, %v701
      %vm703 = vcmp.eq.s32.totalorder %v398, 1
      %v704 = vsel %vm703, %v546, 0.0
      %v705 = vadd.f32 %v698, %v704
      %v706 = vsub.f32 %v616, %v691
      %v707 = vmul.f32 %v706, 1.442695
      %v708 = vpow.pop %v707
      %v709 = vadd.f32 %v702, %v708
      %vm710 = vcmp.eq.s32.totalorder %v398, 2
      %v711 = vsel %vm710, %v616, 0.0
      %v712 = vadd.f32 %v705, %v711
      %v713 = vsub.f32 %v686, %v691
      %v714 = vmul.f32 %v713, 1.442695
      %v715 = vpow.pop %v714
      %v716 = vadd.f32 %v709, %v715
      %vm717 = vcmp.eq.s32.totalorder %v398, 3
      %v718 = vsel %vm717, %v686, 0.0
      %v719 = vadd.f32 %v712, %v718
      %v720 = vlog2.pop %v716
      %v721 = vmul.f32 %v720, 0.6931472
      %v722 = vadd.f32 %v691, %v721
      %v723 = vld [vmem:[%s284] sm:$0x1]
      %v724 = vsub.f32 %v722, %v719
      %v725 = vsel %vm399, %v724, 0.0
      %726 = vadd.xlane.f32.xlu0 %v725
      %v727 = vpop.xlane.xlu0 %726
      %v728 = vrot.slane %v727, 4
      %v729 = vadd.f32 %v727, %v728
      %v730 = vrot.slane %v729, 2
      %v731 = vadd.f32 %v729, %v730
      %v732 = vrot.slane %v731, 1
      %v733 = vadd.f32 %v731, %v732
      %s734 = vtos %v733
      %v735 = vstv %s734
      %v736 = vadd.f32 %v723, %v735
      %vm737 = vcmask 0
      %738 = vst.msk [vmem:[%s284] sm:$0x1] %vm737, %v736
      %p739 = scmp.lt.s32.totalorder %s20, 1
      %s740 = scalar_select %p739, %s20, 1
      %p741 = scmp.lt.s32.totalorder %s21, 1
      %s742 = scalar_select %p741, %s21, 1
      %s743 = smul.addr %s740, 2
      %s744 = sadd.s32 %s742, %s743
      %s745 = scalar_lea.vmem %s4, %s744
      // Predicated region
      $region41: #{tpu_custom_call.1} parent=35 // pred_check
        %p746 = pneg %p157
      $region42: #{tpu_custom_call.1} parent=35 // pred_check_branch
        %748 = sbr.rel (%p746) target = $region44
      $region43: #{tpu_custom_call.1} parent=35 // pred_region
        _
      $region44: #{tpu_custom_call.1} parent=35 // pred_fallthru
        _
    $region36: #{tpu_custom_call.1} parent=5 // pred_fallthru
      _
    %p749 = scmp.le.s32.totalorder 2, %s10
    // Predicated region
    $region45: #{tpu_custom_call.1} parent=5 // pred_check
      %p750 = pneg %p749
    $region46: #{tpu_custom_call.1} parent=5 // pred_check_branch
      %752 = sbr.rel (%p750) target = $region48
    $region47: #{tpu_custom_call.1} parent=5 // pred_region
      %s753 = ssub.s32 %s10, 2
      // Predicated region
      $region49: #{tpu_custom_call.1} parent=47 // pred_check
        %p754 = pneg %p163
      $region50: #{tpu_custom_call.1} parent=47 // pred_check_branch
        %756 = sbr.rel (%p754) target = $region52
      $region51: #{tpu_custom_call.1} parent=47 // pred_region
        %p757 = scmp.lt.s32.totalorder %s23, 1
        %s758 = scalar_select %p757, %s23, 1
        %p759 = scmp.lt.s32.totalorder %s24, 1
        %s760 = scalar_select %p759, %s24, 1
        %s761 = smul.addr %s758, 2
        %s762 = sadd.s32 %s760, %s761
        %s763 = scalar_lea.vmem %s4, %s762
      $region52: #{tpu_custom_call.1} parent=47 // pred_fallthru
        _
    $region48: #{tpu_custom_call.1} parent=5 // pred_fallthru
      _
  $region6: #{tpu_custom_call.1} parent=0 // loop_footer
    %s14 = sadd.s32 1, %s10
  $region7: #{tpu_custom_call.1} parent=0 // loop_footer_branch
    %9 = sbr.rel target = $region3
  $region8: #{tpu_custom_call.1} parent=0 // loop_exit
    _

</llo_original>
